<compile_context>
chip_gen: v6e
topology: v6e:2x2x1
jax: 0.10.0
libtpu: 0.0.40
codegen_flags: <defaults>
</compile_context>

<pallas_src>
import math
import numpy as np
import jax
import jax.numpy as jnp
from jax.experimental import pallas as pl
from jax.experimental.pallas import tpu as pltpu

INPUT_SIZE = 4     # number of channels J (len(ffns) == len(ffns_1))
FEAT = 13          # per-channel feature size
BATCH = 2
PAD = 128          # lane-aligned width used for every in-kernel matmul


# ----------------------------------------------------------------------------
# Kernel: the whole forward pass for one batch tile, everything VMEM-resident.
# ----------------------------------------------------------------------------
def _kernel(x_ref, w_ref, b_ref, out_ref):
    xb = x_ref[...]                      # (TB, 128) bf16 ; cols [0, 13*J) real, rest 0
    bt = b_ref[...]                      # (8, 128) f32 bias tile (rows 0..3 used)
    b0 = bt[0:1, :]
    b1 = bt[1:2, :]
    b2 = bt[2:3, :]
    b3 = bt[3:4, :]

    bf16 = jnp.bfloat16

    def mm(a, w):                        # MXU matmul, f32 accumulation
        return jnp.dot(a, w, preferred_element_type=jnp.float32)

    # ffns[j]: per-channel Linear(13, 20), activation=False (block-diagonal)
    h = mm(xb, w_ref[0]) + b0                                        # (TB,128) f32
    # ffns_1[j]: per-channel Linear(20, 13) + ReLU (block-diagonal)
    o = jnp.maximum(mm(h.astype(bf16), w_ref[1]) + b1, 0.0)
    # ffns2[0]: Linear(13*J, 100) + ReLU
    z = jnp.maximum(mm(o.astype(bf16), w_ref[2]) + b2, 0.0)
    # ffns2[1]: Linear(100, 1), no activation
    y = mm(z.astype(bf16), w_ref[3]) + b3
    # Dropout is identity at inference.
    out_ref[...] = jax.nn.sigmoid(y[:, 0:1])                         # (TB, 1) f32


# ----------------------------------------------------------------------------
# Parameter init (faithful to FFN.init_layer: kaiming_uniform relu, zero bias)
# ----------------------------------------------------------------------------
def _kaiming_uniform(key, fan_in, fan_out):
    # kaiming_uniform(mode='fan_in', nonlinearity='relu'): bound = sqrt(6 / fan_in)
    bound = math.sqrt(6.0 / fan_in)
    return jax.random.uniform(key, (fan_in, fan_out), jnp.float32, -bound, bound)


def init_params(key, input_size=INPUT_SIZE):
    """Raw, torch-structured params (weights stored as (in, out) = torch weight.T)."""
    keys = iter(jax.random.split(key, 2 * input_size + 2))
    raw = {
        "w0": [_kaiming_uniform(next(keys), FEAT, 20) for _ in range(input_size)],
        "b0": [jnp.zeros((20,), jnp.float32) for _ in range(input_size)],
        "w1": [_kaiming_uniform(next(keys), 20, FEAT) for _ in range(input_size)],
        "b1": [jnp.zeros((FEAT,), jnp.float32) for _ in range(input_size)],
        "w2": _kaiming_uniform(next(keys), input_size * FEAT, 100),
        "b2": jnp.zeros((100,), jnp.float32),
        "w3": _kaiming_uniform(next(keys), 100, 1),
        "b3": jnp.zeros((1,), jnp.float32),
    }
    return raw


def pack_params(raw):
    """Pack all weights into one (4,128,128) bf16 blob and biases into one (8,128) f32 tile."""
    J = len(raw["w0"])
    assert J * 20 <= PAD and J * FEAT <= PAD and 100 <= PAD

    W0_cm = jax.scipy.linalg.block_diag(*raw["w0"])   # (13J, 20J), channel-major rows/cols
    W1_cm = jax.scipy.linalg.block_diag(*raw["w1"])   # (20J, 13J)

    # Bake x.permute(0,2,1) into W0's rows: natural (feat-major) row k = f*J + j
    # must pick up channel-major row j*13 + f.
    k = np.arange(FEAT * J)
    perm = (k % J) * FEAT + (k // J)
    W0_nat = np.asarray(W0_cm)[perm, :]

    def tile(w):
        w = np.asarray(w, np.float32)
        t = np.zeros((PAD, PAD), np.float32)
        t[: w.shape[0], : w.shape[1]] = w
        return t

    wblob = jnp.asarray(
        np.stack([tile(W0_nat), tile(W1_cm), tile(raw["w2"]), tile(raw["w3"])])
    ).astype(jnp.bfloat16)                            # (4, 128, 128) bf16

    def brow(b):
        b = np.asarray(b, np.float32)
        v = np.zeros((PAD,), np.float32)
        v[: b.shape[0]] = b
        return v

    b0 = np.concatenate([np.asarray(b, np.float32) for b in raw["b0"]])   # (20J,) ch-major
    b1 = np.concatenate([np.asarray(b, np.float32) for b in raw["b1"]])   # (13J,) ch-major
    zero = np.zeros((PAD,), np.float32)
    bblob = jnp.asarray(
        np.stack([brow(b0), brow(b1), brow(raw["b2"]), brow(raw["b3"]),
                  zero, zero, zero, zero])
    )                                                 # (8, 128) f32
    return wblob, bblob


# ----------------------------------------------------------------------------
# Wrapper
# ----------------------------------------------------------------------------
def time_combination_nn_forward(x, packed):
    """x: (B, 13, J) float32, same layout as the PyTorch module input. Returns (B,)."""
    wblob, bblob = packed
    B, feat, J = x.shape
    assert feat == FEAT
    ftot = feat * J
    assert ftot <= PAD

    # Natural feat-major flatten (free reshape) — NO transpose; the channel
    # permutation lives in wblob[0]'s rows.  Zero-pad to 128 lanes, cast to bf16.
    xf = x.reshape(B, ftot).astype(jnp.bfloat16)
    x_in = jnp.zeros((B, PAD), jnp.bfloat16).at[:, :ftot].set(xf)

    TB = B if B <= 128 else 128
    grid = (pl.cdiv(B, TB),)

    cost = pl.CostEstimate(
        flops=2 * B * 4 * PAD * PAD,
        transcendentals=B,
        bytes_accessed=x_in.size * 2 + wblob.size * 2 + bblob.size * 4 + B * 4,
    )

    out = pl.pallas_call(
        _kernel,
        out_shape=jax.ShapeDtypeStruct((B, 1), jnp.float32),
        grid=grid,
        in_specs=[
            pl.BlockSpec((TB, PAD), lambda i: (i, 0)),            # batch-tiled x
            pl.BlockSpec((4, PAD, PAD), lambda i: (0, 0, 0)),     # resident weight blob
            pl.BlockSpec((8, PAD), lambda i: (0, 0)),             # resident bias tile
        ],
        out_specs=pl.BlockSpec((TB, 1), lambda i: (i, 0)),
        compiler_params=pltpu.CompilerParams(dimension_semantics=("parallel",)),
        cost_estimate=cost,
    )(x_in, wblob, bblob)
    # torch returns sigmoid(x.flatten()) -> shape (B,)
    return out[:, 0]


# ----------------------------------------------------------------------------
# Torch-faithful pure-JAX reference (per-channel loop + explicit permute),
# mirroring the kernel's bf16-weight / f32-accumulate numerics.
# ----------------------------------------------------------------------------
def _bdot(a, w):
    return jnp.dot(a.astype(jnp.bfloat16), w.astype(jnp.bfloat16),
                   preferred_element_type=jnp.float32)


def reference_forward(x, raw):
    B, feat, J = x.shape
    xp = jnp.transpose(x, (0, 2, 1))                  # (B, J, 13) — torch's permute(0,2,1)
    cols = []
    for j in range(J):
        h = _bdot(xp[:, j, :], raw["w0"][j]) + raw["b0"][j]                 # no activation
        o = jnp.maximum(_bdot(h, raw["w1"][j]) + raw["b1"][j], 0.0)         # ReLU
        cols.append(o)
    flat = jnp.concatenate(cols, axis=1)              # (B, 13*J) channel-major flatten
    z = jnp.maximum(_bdot(flat, raw["w2"]) + raw["b2"], 0.0)
    y = _bdot(z, raw["w3"]) + raw["b3"]
    return jax.nn.sigmoid(y[:, 0])


if __name__ == "__main__":
    key = jax.random.PRNGKey(0)
    kx, kp = jax.random.split(key)

    x = jax.random.normal(kx, (BATCH, FEAT, INPUT_SIZE), jnp.float32)
    raw = init_params(kp, INPUT_SIZE)

    y = jax.block_until_ready(time_combination_nn_forward(x, pack_params(raw)))
    y_ref = reference_forward(x, raw)

    assert y.shape == (BATCH,)
    assert bool(jnp.all(jnp.isfinite(y)))
    assert jnp.allclose(y, y_ref, atol=1e-3, rtol=1e-3), (y, y_ref)

    # Extra check with non-zero random biases to exercise bias packing / row order.
    kb0, kb1, kb2, kb3 = jax.random.split(jax.random.PRNGKey(1), 4)
    raw2 = dict(raw)
    raw2["b0"] = [0.1 * jax.random.normal(jax.random.fold_in(kb0, j), (20,), jnp.float32)
                  for j in range(INPUT_SIZE)]
    raw2["b1"] = [0.1 * jax.random.normal(jax.random.fold_in(kb1, j), (FEAT,), jnp.float32)
                  for j in range(INPUT_SIZE)]
    raw2["b2"] = 0.1 * jax.random.normal(kb2, (100,), jnp.float32)
    raw2["b3"] = 0.1 * jax.random.normal(kb3, (1,), jnp.float32)
    y2 = jax.block_until_ready(time_combination_nn_forward(x, pack_params(raw2)))
    y2_ref = reference_forward(x, raw2)
    assert jnp.allclose(y2, y2_ref, atol=1e-3, rtol=1e-3), (y2, y2_ref)

    print("KERNEL_OK")
</pallas_src>

<mosaic_0001>
module attributes {stable_mosaic.version = 11 : i64} {
  func.func @_kernel(%arg0: i32, %arg1: memref<2x128xbf16, #tpu.memory_space<vmem>>, %arg2: memref<4x128x128xbf16, #tpu.memory_space<vmem>>, %arg3: memref<8x128xf32, #tpu.memory_space<vmem>>, %arg4: memref<2x1xf32, #tpu.memory_space<vmem>>) attributes {dimension_semantics = [#tpu.dimension_semantics<parallel>], iteration_bounds = array<i64: 1>, scalar_prefetch = 0 : i64, scratch_operands = 0 : i64, tpu.core_type = #tpu.core_type<tc>, window_params = [{transform_indices = @transform_0, window_bounds = array<i64: 2, 128>}, {pipeline_mode = #tpu.pipeline_mode<synchronous>, transform_indices = @transform_1, window_bounds = array<i64: 4, 128, 128>}, {pipeline_mode = #tpu.pipeline_mode<synchronous>, transform_indices = @transform_2, window_bounds = array<i64: 8, 128>}, {transform_indices = @transform_3, window_bounds = array<i64: 2, 1>}]} {
    %c0 = arith.constant 0 : index
    %c0_0 = arith.constant 0 : index
    %0 = vector.load %arg1[%c0, %c0_0] : memref<2x128xbf16, #tpu.memory_space<vmem>>, vector<2x128xbf16>
    %c0_1 = arith.constant 0 : index
    %c0_2 = arith.constant 0 : index
    %1 = vector.load %arg3[%c0_1, %c0_2] : memref<8x128xf32, #tpu.memory_space<vmem>>, vector<8x128xf32>
    %2 = vector.extract_strided_slice %1 {offsets = [0, 0], sizes = [1, 128], strides = [1, 1]} : vector<8x128xf32> to vector<1x128xf32>
    %3 = vector.extract_strided_slice %1 {offsets = [1, 0], sizes = [1, 128], strides = [1, 1]} : vector<8x128xf32> to vector<1x128xf32>
    %4 = vector.extract_strided_slice %1 {offsets = [2, 0], sizes = [1, 128], strides = [1, 1]} : vector<8x128xf32> to vector<1x128xf32>
    %5 = vector.extract_strided_slice %1 {offsets = [3, 0], sizes = [1, 128], strides = [1, 1]} : vector<8x128xf32> to vector<1x128xf32>
    %c0_3 = arith.constant 0 : index
    %c0_4 = arith.constant 0 : index
    %c0_5 = arith.constant 0 : index
    %6 = vector.load %arg2[%c0_3, %c0_4, %c0_5] : memref<4x128x128xbf16, #tpu.memory_space<vmem>>, vector<1x128x128xbf16>
    %7 = vector.shape_cast %6 : vector<1x128x128xbf16> to vector<128x128xbf16>
    %cst = arith.constant dense<0.000000e+00> : vector<2x128xf32>
    %8 = tpu.matmul %0, %7, %cst {dimension_numbers = #tpu.dot_dimension_numbers<[1], [0], [0], [1], [0, 0, 1, 1], [], []>} : vector<2x128xbf16>, vector<128x128xbf16>, vector<2x128xf32> -> vector<2x128xf32>
    %9 = vector.broadcast %2 : vector<1x128xf32> to vector<2x128xf32>
    %10 = arith.addf %8, %9 : vector<2x128xf32>
    %11 = arith.truncf %10 : vector<2x128xf32> to vector<2x128xbf16>
    %c1 = arith.constant 1 : index
    %c0_6 = arith.constant 0 : index
    %c0_7 = arith.constant 0 : index
    %12 = vector.load %arg2[%c1, %c0_6, %c0_7] : memref<4x128x128xbf16, #tpu.memory_space<vmem>>, vector<1x128x128xbf16>
    %13 = vector.shape_cast %12 : vector<1x128x128xbf16> to vector<128x128xbf16>
    %cst_8 = arith.constant dense<0.000000e+00> : vector<2x128xf32>
    %14 = tpu.matmul %11, %13, %cst_8 {dimension_numbers = #tpu.dot_dimension_numbers<[1], [0], [0], [1], [0, 0, 1, 1], [], []>} : vector<2x128xbf16>, vector<128x128xbf16>, vector<2x128xf32> -> vector<2x128xf32>
    %15 = vector.broadcast %3 : vector<1x128xf32> to vector<2x128xf32>
    %16 = arith.addf %14, %15 : vector<2x128xf32>
    %cst_9 = arith.constant 0.000000e+00 : f32
    %17 = vector.broadcast %cst_9 : f32 to vector<2x128xf32>
    %18 = arith.maximumf %16, %17 : vector<2x128xf32>
    %19 = arith.truncf %18 : vector<2x128xf32> to vector<2x128xbf16>
    %c2 = arith.constant 2 : index
    %c0_10 = arith.constant 0 : index
    %c0_11 = arith.constant 0 : index
    %20 = vector.load %arg2[%c2, %c0_10, %c0_11] : memref<4x128x128xbf16, #tpu.memory_space<vmem>>, vector<1x128x128xbf16>
    %21 = vector.shape_cast %20 : vector<1x128x128xbf16> to vector<128x128xbf16>
    %cst_12 = arith.constant dense<0.000000e+00> : vector<2x128xf32>
    %22 = tpu.matmul %19, %21, %cst_12 {dimension_numbers = #tpu.dot_dimension_numbers<[1], [0], [0], [1], [0, 0, 1, 1], [], []>} : vector<2x128xbf16>, vector<128x128xbf16>, vector<2x128xf32> -> vector<2x128xf32>
    %23 = vector.broadcast %4 : vector<1x128xf32> to vector<2x128xf32>
    %24 = arith.addf %22, %23 : vector<2x128xf32>
    %cst_13 = arith.constant 0.000000e+00 : f32
    %25 = vector.broadcast %cst_13 : f32 to vector<2x128xf32>
    %26 = arith.maximumf %24, %25 : vector<2x128xf32>
    %27 = arith.truncf %26 : vector<2x128xf32> to vector<2x128xbf16>
    %c3 = arith.constant 3 : index
    %c0_14 = arith.constant 0 : index
    %c0_15 = arith.constant 0 : index
    %28 = vector.load %arg2[%c3, %c0_14, %c0_15] : memref<4x128x128xbf16, #tpu.memory_space<vmem>>, vector<1x128x128xbf16>
    %29 = vector.shape_cast %28 : vector<1x128x128xbf16> to vector<128x128xbf16>
    %cst_16 = arith.constant dense<0.000000e+00> : vector<2x128xf32>
    %30 = tpu.matmul %27, %29, %cst_16 {dimension_numbers = #tpu.dot_dimension_numbers<[1], [0], [0], [1], [0, 0, 1, 1], [], []>} : vector<2x128xbf16>, vector<128x128xbf16>, vector<2x128xf32> -> vector<2x128xf32>
    %31 = vector.broadcast %5 : vector<1x128xf32> to vector<2x128xf32>
    %32 = arith.addf %30, %31 : vector<2x128xf32>
    %33 = vector.extract_strided_slice %32 {offsets = [0, 0], sizes = [2, 1], strides = [1, 1]} : vector<2x128xf32> to vector<2x1xf32>
    %34 = arith.negf %33 : vector<2x1xf32>
    %35 = math.exp %34 : vector<2x1xf32>
    %cst_17 = arith.constant 1.000000e+00 : f32
    %36 = vector.broadcast %cst_17 : f32 to vector<2x1xf32>
    %37 = arith.addf %36, %35 : vector<2x1xf32>
    %38 = arith.divf %36, %37 : vector<2x1xf32>
    %c0_18 = arith.constant 0 : index
    %c0_19 = arith.constant 0 : index
    %39 = vector.load %arg4[%c0_18, %c0_19] : memref<2x1xf32, #tpu.memory_space<vmem>>, vector<2x1xf32>
    tpu.vector_store %arg4[%c0_18, %c0_19], %38 {strides = array<i32>} : memref<2x1xf32, #tpu.memory_space<vmem>>, vector<2x1xf32>,
    return
  }
  func.func @transform_0(%arg0: i32) -> (i32, i32) {
    %c0_i32 = arith.constant 0 : i32
    %c0_i32_0 = arith.constant 0 : i32
    return %arg0, %c0_i32 : i32, i32
  }
  func.func @transform_1(%arg0: i32) -> (i32, i32, i32) {
    %c0_i32 = arith.constant 0 : i32
    %c0_i32_0 = arith.constant 0 : i32
    %c0_i32_1 = arith.constant 0 : i32
    %c0_i32_2 = arith.constant 0 : i32
    return %c0_i32, %c0_i32_0, %c0_i32_1 : i32, i32, i32
  }
  func.func @transform_2(%arg0: i32) -> (i32, i32) {
    %c0_i32 = arith.constant 0 : i32
    %c0_i32_0 = arith.constant 0 : i32
    %c0_i32_1 = arith.constant 0 : i32
    return %c0_i32, %c0_i32_0 : i32, i32
  }
  func.func @transform_3(%arg0: i32) -> (i32, i32) {
    %c0_i32 = arith.constant 0 : i32
    %c0_i32_0 = arith.constant 0 : i32
    return %arg0, %c0_i32 : i32, i32
  }
}

</mosaic_0001>

<llo_original>
// kernel: tpu_custom_call.1
$region0: #{tpu_custom_call.1}
  #allocation0 [shape = 'u32[]', space=smem, size = 0x4, offset = 0x4, fixed_abs, tag = 'smem constant byte address 0x4 - core index']
  #allocation1 [shape = 'u32[144,128]{1,0:T(1,128)}', space=vmem, size = 0x12000, scoped, tag = 'internal scratch']
  %s0 = inlined_call_operand.hbm [shape: bf16[2,128], index: 0, kind: input, shape index: {}]
  %s1 = inlined_call_operand.hbm [shape: bf16[4,128,128], index: 1, kind: input, shape index: {}]
  %s2 = inlined_call_operand.hbm [shape: f32[8,128], index: 2, kind: input, shape index: {}]
  %s3 = inlined_call_operand.vmem [shape: f32[2,1], index: 3, kind: output, shape index: {}]
  %s4 = sld [smem:[#allocation0]]
  $region34: #{tpu_custom_call.1} parent=0
    _
  %s6 = ssub.s32 1, %s4
  %s7 = scalar_select 0, %s6, %s4
  $region1: #{tpu_custom_call.1} parent=0
    #allocation2 [shape = 'u8[512]{0}', space=vmem, size = 0x400, scoped, tag = 'input window, operand 0, single buffered']
    #allocation3 [shape = 's32[1]{0}', space=sflag, size = 0x4, scoped, tag = 'scoped memory for tpu_custom_call.1']
    #allocation4 [shape = 'u8[131072]{0}', space=vmem, size = 0x20000, scoped, tag = 'input window, operand 1, single buffered']
    #allocation5 [shape = 's32[1]{0}', space=sflag, size = 0x4, scoped, tag = 'scoped memory for tpu_custom_call.1']
    #allocation6 [shape = 'u8[4096]{0}', space=vmem, size = 0x1000, scoped, tag = 'input window, operand 2, single buffered']
    %8 = vsyncpa [#allocation3], 0
    %9 = vsyncpa [#allocation5], 0
    // Predicated region
    $region2: #{tpu_custom_call.1} parent=1 // pred_check
      _
    $region3: #{tpu_custom_call.1} parent=1 // pred_check_branch
      %11 = sbr.rel (0) target = $region5
    $region4: #{tpu_custom_call.1} parent=1 // pred_region
      %s13 = ssub.s32 16, 16
      %14 = vsyncadd [#allocation3], %s13
      %s16 = sshll.u32 [#allocation2], 4
      %s17 = int_to_ptr.vmem [resolvable:$true] %s16
      %19 = dma.hbm_to_vmem [thread:$0]  %s0, 16, %s17, [#allocation3]
    $region5: #{tpu_custom_call.1} parent=1 // pred_fallthru
      _
    // Predicated region
    $region6: #{tpu_custom_call.1} parent=1 // pred_check
      _
    $region7: #{tpu_custom_call.1} parent=1 // pred_check_branch
      %21 = sbr.rel (0) target = $region9
    $region8: #{tpu_custom_call.1} parent=1 // pred_region
      %s23 = ssub.s32 4096, 4096
      %24 = vsyncadd [#allocation5], %s23
      %s25 = sshll.u32 [#allocation4], 4
      %s26 = int_to_ptr.vmem [resolvable:$true] %s25
      %31 = dma.hbm_to_vmem [thread:$0]  %s1, 4096, %s26, [#allocation5], 64, 64, 4
    $region9: #{tpu_custom_call.1} parent=1 // pred_fallthru
      _
    // Predicated region
    $region10: #{tpu_custom_call.1} parent=1 // pred_check
      _
    $region11: #{tpu_custom_call.1} parent=1 // pred_check_branch
      %33 = sbr.rel (0) target = $region13
    $region12: #{tpu_custom_call.1} parent=1 // pred_region
      %s35 = ssub.s32 128, 128
      %36 = vsyncadd [#allocation5], %s35
      %s38 = sshll.u32 [#allocation6], 4
      %s39 = int_to_ptr.vmem [resolvable:$true] %s38
      %41 = dma.hbm_to_vmem [thread:$0]  %s2, 128, %s39, [#allocation5]
    $region13: #{tpu_custom_call.1} parent=1 // pred_fallthru
      _
    // Predicated region
    $region14: #{tpu_custom_call.1} parent=1 // pred_check
      _
    $region15: #{tpu_custom_call.1} parent=1 // pred_check_branch
      %43 = sbr.rel (0) target = $region17
    $region16: #{tpu_custom_call.1} parent=1 // pred_region
      %44 = dma.done [#allocation3], 16
    $region17: #{tpu_custom_call.1} parent=1 // pred_fallthru
      _
    // Predicated region
    $region18: #{tpu_custom_call.1} parent=1 // pred_check
      _
    $region19: #{tpu_custom_call.1} parent=1 // pred_check_branch
      %46 = sbr.rel (0) target = $region21
    $region20: #{tpu_custom_call.1} parent=1 // pred_region
      %47 = dma.done [#allocation5], 4096
    $region21: #{tpu_custom_call.1} parent=1 // pred_fallthru
      _
    // Predicated region
    $region22: #{tpu_custom_call.1} parent=1 // pred_check
      _
    $region23: #{tpu_custom_call.1} parent=1 // pred_check_branch
      %49 = sbr.rel (0) target = $region25
    $region24: #{tpu_custom_call.1} parent=1 // pred_region
      %50 = dma.done [#allocation5], 128
    $region25: #{tpu_custom_call.1} parent=1 // pred_fallthru
      _
    %v52 = vld [vmem:[#allocation2] sm:$0x1]
    %v53 = vld [vmem:[#allocation6] sm:$0xff]
    %v54 = vld [vmem:[#allocation4] sm:$0xf]
    %v55 = vld [vmem:[#allocation4 + $0x4] sm:$0xf]
    %v56 = vld [vmem:[#allocation4 + $0x8] sm:$0xf]
    %v57 = vld [vmem:[#allocation4 + $0xc] sm:$0xf]
    %v58 = vld [vmem:[#allocation4 + $0x10] sm:$0xf]
    %v59 = vld [vmem:[#allocation4 + $0x14] sm:$0xf]
    %v60 = vld [vmem:[#allocation4 + $0x18] sm:$0xf]
    %v61 = vld [vmem:[#allocation4 + $0x1c] sm:$0xf]
    %v62 = vld [vmem:[#allocation4 + $0x20] sm:$0xf]
    %v63 = vld [vmem:[#allocation4 + $0x24] sm:$0xf]
    %v64 = vld [vmem:[#allocation4 + $0x28] sm:$0xf]
    %v65 = vld [vmem:[#allocation4 + $0x2c] sm:$0xf]
    %v66 = vld [vmem:[#allocation4 + $0x30] sm:$0xf]
    %v67 = vld [vmem:[#allocation4 + $0x34] sm:$0xf]
    %v68 = vld [vmem:[#allocation4 + $0x38] sm:$0xf]
    %v69 = vld [vmem:[#allocation4 + $0x3c] sm:$0xf]
    %v70 = vlaneseq
    %v71 = vshrl.u32 %v70, 7
    %v72 = vsub.s32 0, %v71
    %v73 = vrot.slane %v53, %v72
    %v90 = vunpack.c.l.b16 %v54
    %v91 = vunpack.c.l.b16 %v55
    %v92 = vunpack.c.l.b16 %v56
    %v93 = vunpack.c.l.b16 %v57
    %v94 = vunpack.c.l.b16 %v58
    %v95 = vunpack.c.l.b16 %v59
    %v96 = vunpack.c.l.b16 %v60
    %v97 = vunpack.c.l.b16 %v61
    %v98 = vunpack.c.l.b16 %v62
    %v99 = vunpack.c.l.b16 %v63
    %v100 = vunpack.c.l.b16 %v64
    %v101 = vunpack.c.l.b16 %v65
    %v102 = vunpack.c.l.b16 %v66
    %v103 = vunpack.c.l.b16 %v67
    %v104 = vunpack.c.l.b16 %v68
    %v105 = vunpack.c.l.b16 %v69
    %v106 = vpack.c.b16 %v91, %v90
    %v107 = vpack.c.b16 %v93, %v92
    %v108 = vpack.c.b16 %v95, %v94
    %v109 = vpack.c.b16 %v97, %v96
    %v110 = vpack.c.b16 %v99, %v98
    %v111 = vpack.c.b16 %v101, %v100
    %v112 = vpack.c.b16 %v103, %v102
    %v113 = vpack.c.b16 %v105, %v104
    %122 = vmatprep.subr.bf16.mxu0 0
    %123 = vmatpush1.bf16.msra.mxu0 %v113
    %124 = vmatprep.subr.bf16.mxu0 0
    %125 = vmatpush1.bf16.msra.mxu0 %v112
    %126 = vmatprep.subr.bf16.mxu0 0
    %127 = vmatpush1.bf16.msra.mxu0 %v111
    %128 = vmatprep.subr.bf16.mxu0 0
    %129 = vmatpush1.bf16.msra.mxu0 %v110
    %130 = vmatprep.subr.bf16.mxu0 0
    %131 = vmatpush1.bf16.msra.mxu0 %v109
    %132 = vmatprep.subr.bf16.mxu0 0
    %133 = vmatpush1.bf16.msra.mxu0 %v108
    %134 = vmatprep.subr.bf16.mxu0 0
    %135 = vmatpush1.bf16.msra.mxu0 %v107
    %136 = vmatprep.subr.bf16.mxu0 0
    %137 = vmatpush1.bf16.msra.mxu0 %v106
    %138 = vmatprep.subr.bf16.mxu0 0
    %139 = vmatpush2.bf16.msra.mxu0 0
    %140 = vmatprep.subr.bf16.mxu0 0
    %141 = vmatpush2.bf16.msra.mxu0 0
    %142 = vmatprep.subr.bf16.mxu0 0
    %143 = vmatpush2.bf16.msra.mxu0 0
    %144 = vmatprep.subr.bf16.mxu0 0
    %145 = vmatpush2.bf16.msra.mxu0 0
    %146 = vmatprep.subr.bf16.mxu0 0
    %147 = vmatpush2.bf16.msra.mxu0 0
    %148 = vmatprep.subr.bf16.mxu0 0
    %149 = vmatpush2.bf16.msra.mxu0 0
    %150 = vmatprep.subr.bf16.mxu0 0
    %151 = vmatpush2.bf16.msra.mxu0 0
    %152 = vmatprep.subr.bf16.mxu0 0
    %153 = vmatpush2.bf16.msra.mxu0 0
    %154 = vmatprep.mubr.bf16.mxu0 0
    %155 = vmatmul.mubr.bf16.gmra.mxu0 %v52
    %v156 = vpop.f32.mrf.mxu0
    %v157 = vadd.f32 %v73, %v156
    %v158 = vpop.f32.mrf.mxu0
    %v159 = vpop.f32.mrf.mxu0
    %v160 = vpop.f32.mrf.mxu0
    %161 = vdwg.mxu0
    %v162 = vpack.c.bf16 %v157, %v157
    %s163 = scalar_lea.vmem [#allocation4], 64
    %v164 = vld [vmem:[%s163] sm:$0xf]
    %v165 = vld [vmem:[%s163 + $0x4] sm:$0xf]
    %v166 = vld [vmem:[%s163 + $0x8] sm:$0xf]
    %v167 = vld [vmem:[%s163 + $0xc] sm:$0xf]
    %v168 = vld [vmem:[%s163 + $0x10] sm:$0xf]
    %v169 = vld [vmem:[%s163 + $0x14] sm:$0xf]
    %v170 = vld [vmem:[%s163 + $0x18] sm:$0xf]
    %v171 = vld [vmem:[%s163 + $0x1c] sm:$0xf]
    %v172 = vld [vmem:[%s163 + $0x20] sm:$0xf]
    %v173 = vld [vmem:[%s163 + $0x24] sm:$0xf]
    %v174 = vld [vmem:[%s163 + $0x28] sm:$0xf]
    %v175 = vld [vmem:[%s163 + $0x2c] sm:$0xf]
    %v176 = vld [vmem:[%s163 + $0x30] sm:$0xf]
    %v177 = vld [vmem:[%s163 + $0x34] sm:$0xf]
    %v178 = vld [vmem:[%s163 + $0x38] sm:$0xf]
    %v179 = vld [vmem:[%s163 + $0x3c] sm:$0xf]
    %v180 = vlaneseq
    %v181 = vshrl.u32 %v180, 7
    %v182 = vsub.s32 1, %v181
    %v183 = vrot.slane %v53, %v182
    %v200 = vunpack.c.l.b16 %v164
    %v201 = vunpack.c.l.b16 %v165
    %v202 = vunpack.c.l.b16 %v166
    %v203 = vunpack.c.l.b16 %v167
    %v204 = vunpack.c.l.b16 %v168
    %v205 = vunpack.c.l.b16 %v169
    %v206 = vunpack.c.l.b16 %v170
    %v207 = vunpack.c.l.b16 %v171
    %v208 = vunpack.c.l.b16 %v172
    %v209 = vunpack.c.l.b16 %v173
    %v210 = vunpack.c.l.b16 %v174
    %v211 = vunpack.c.l.b16 %v175
    %v212 = vunpack.c.l.b16 %v176
    %v213 = vunpack.c.l.b16 %v177
    %v214 = vunpack.c.l.b16 %v178
    %v215 = vunpack.c.l.b16 %v179
    %v216 = vpack.c.b16 %v201, %v200
    %v217 = vpack.c.b16 %v203, %v202
    %v218 = vpack.c.b16 %v205, %v204
    %v219 = vpack.c.b16 %v207, %v206
    %v220 = vpack.c.b16 %v209, %v208
    %v221 = vpack.c.b16 %v211, %v210
    %v222 = vpack.c.b16 %v213, %v212
    %v223 = vpack.c.b16 %v215, %v214
    %232 = vmatprep.subr.bf16.mxu0 0
    %233 = vmatpush1.bf16.msra.mxu0 %v223
    %234 = vmatprep.subr.bf16.mxu0 0
    %235 = vmatpush1.bf16.msra.mxu0 %v222
    %236 = vmatprep.subr.bf16.mxu0 0
    %237 = vmatpush1.bf16.msra.mxu0 %v221
    %238 = vmatprep.subr.bf16.mxu0 0
    %239 = vmatpush1.bf16.msra.mxu0 %v220
    %240 = vmatprep.subr.bf16.mxu0 0
    %241 = vmatpush1.bf16.msra.mxu0 %v219
    %242 = vmatprep.subr.bf16.mxu0 0
    %243 = vmatpush1.bf16.msra.mxu0 %v218
    %244 = vmatprep.subr.bf16.mxu0 0
    %245 = vmatpush1.bf16.msra.mxu0 %v217
    %246 = vmatprep.subr.bf16.mxu0 0
    %247 = vmatpush1.bf16.msra.mxu0 %v216
    %248 = vmatprep.subr.bf16.mxu0 0
    %249 = vmatpush2.bf16.msra.mxu0 0
    %250 = vmatprep.subr.bf16.mxu0 0
    %251 = vmatpush2.bf16.msra.mxu0 0
    %252 = vmatprep.subr.bf16.mxu0 0
    %253 = vmatpush2.bf16.msra.mxu0 0
    %254 = vmatprep.subr.bf16.mxu0 0
    %255 = vmatpush2.bf16.msra.mxu0 0
    %256 = vmatprep.subr.bf16.mxu0 0
    %257 = vmatpush2.bf16.msra.mxu0 0
    %258 = vmatprep.subr.bf16.mxu0 0
    %259 = vmatpush2.bf16.msra.mxu0 0
    %260 = vmatprep.subr.bf16.mxu0 0
    %261 = vmatpush2.bf16.msra.mxu0 0
    %262 = vmatprep.subr.bf16.mxu0 0
    %263 = vmatpush2.bf16.msra.mxu0 0
    %264 = vmatprep.mubr.bf16.mxu0 0
    %265 = vmatmul.mubr.bf16.gmra.mxu0 %v162
    %v266 = vpop.f32.mrf.mxu0
    %v267 = vadd.f32 %v183, %v266
    %v268 = vpop.f32.mrf.mxu0
    %v269 = vpop.f32.mrf.mxu0
    %v270 = vpop.f32.mrf.mxu0
    %271 = vdwg.mxu0
    %v272 = vmax.f32 %v267, 0.0
    %v273 = vpack.c.bf16 %v272, %v272
    %s274 = scalar_lea.vmem [#allocation4], 128
    %v275 = vld [vmem:[%s274] sm:$0xf]
    %v276 = vld [vmem:[%s274 + $0x4] sm:$0xf]
    %v277 = vld [vmem:[%s274 + $0x8] sm:$0xf]
    %v278 = vld [vmem:[%s274 + $0xc] sm:$0xf]
    %v279 = vld [vmem:[%s274 + $0x10] sm:$0xf]
    %v280 = vld [vmem:[%s274 + $0x14] sm:$0xf]
    %v281 = vld [vmem:[%s274 + $0x18] sm:$0xf]
    %v282 = vld [vmem:[%s274 + $0x1c] sm:$0xf]
    %v283 = vld [vmem:[%s274 + $0x20] sm:$0xf]
    %v284 = vld [vmem:[%s274 + $0x24] sm:$0xf]
    %v285 = vld [vmem:[%s274 + $0x28] sm:$0xf]
    %v286 = vld [vmem:[%s274 + $0x2c] sm:$0xf]
    %v287 = vld [vmem:[%s274 + $0x30] sm:$0xf]
    %v288 = vld [vmem:[%s274 + $0x34] sm:$0xf]
    %v289 = vld [vmem:[%s274 + $0x38] sm:$0xf]
    %v290 = vld [vmem:[%s274 + $0x3c] sm:$0xf]
    %v291 = vlaneseq
    %v292 = vshrl.u32 %v291, 7
    %v293 = vsub.s32 2, %v292
    %v294 = vrot.slane %v53, %v293
    %v311 = vunpack.c.l.b16 %v275
    %v312 = vunpack.c.l.b16 %v276
    %v313 = vunpack.c.l.b16 %v277
    %v314 = vunpack.c.l.b16 %v278
    %v315 = vunpack.c.l.b16 %v279
    %v316 = vunpack.c.l.b16 %v280
    %v317 = vunpack.c.l.b16 %v281
    %v318 = vunpack.c.l.b16 %v282
    %v319 = vunpack.c.l.b16 %v283
    %v320 = vunpack.c.l.b16 %v284
    %v321 = vunpack.c.l.b16 %v285
    %v322 = vunpack.c.l.b16 %v286
    %v323 = vunpack.c.l.b16 %v287
    %v324 = vunpack.c.l.b16 %v288
    %v325 = vunpack.c.l.b16 %v289
    %v326 = vunpack.c.l.b16 %v290
    %v327 = vpack.c.b16 %v312, %v311
    %v328 = vpack.c.b16 %v314, %v313
    %v329 = vpack.c.b16 %v316, %v315
    %v330 = vpack.c.b16 %v318, %v317
    %v331 = vpack.c.b16 %v320, %v319
    %v332 = vpack.c.b16 %v322, %v321
    %v333 = vpack.c.b16 %v324, %v323
    %v334 = vpack.c.b16 %v326, %v325
    %343 = vmatprep.subr.bf16.mxu0 0
    %344 = vmatpush1.bf16.msra.mxu0 %v334
    %345 = vmatprep.subr.bf16.mxu0 0
    %346 = vmatpush1.bf16.msra.mxu0 %v333
    %347 = vmatprep.subr.bf16.mxu0 0
    %348 = vmatpush1.bf16.msra.mxu0 %v332
    %349 = vmatprep.subr.bf16.mxu0 0
    %350 = vmatpush1.bf16.msra.mxu0 %v331
    %351 = vmatprep.subr.bf16.mxu0 0
    %352 = vmatpush1.bf16.msra.mxu0 %v330
    %353 = vmatprep.subr.bf16.mxu0 0
    %354 = vmatpush1.bf16.msra.mxu0 %v329
    %355 = vmatprep.subr.bf16.mxu0 0
    %356 = vmatpush1.bf16.msra.mxu0 %v328
    %357 = vmatprep.subr.bf16.mxu0 0
    %358 = vmatpush1.bf16.msra.mxu0 %v327
    %359 = vmatprep.subr.bf16.mxu0 0
    %360 = vmatpush2.bf16.msra.mxu0 0
    %361 = vmatprep.subr.bf16.mxu0 0
    %362 = vmatpush2.bf16.msra.mxu0 0
    %363 = vmatprep.subr.bf16.mxu0 0
    %364 = vmatpush2.bf16.msra.mxu0 0
    %365 = vmatprep.subr.bf16.mxu0 0
    %366 = vmatpush2.bf16.msra.mxu0 0
    %367 = vmatprep.subr.bf16.mxu0 0
    %368 = vmatpush2.bf16.msra.mxu0 0
    %369 = vmatprep.subr.bf16.mxu0 0
    %370 = vmatpush2.bf16.msra.mxu0 0
    %371 = vmatprep.subr.bf16.mxu0 0
    %372 = vmatpush2.bf16.msra.mxu0 0
    %373 = vmatprep.subr.bf16.mxu0 0
    %374 = vmatpush2.bf16.msra.mxu0 0
    %375 = vmatprep.mubr.bf16.mxu0 0
    %376 = vmatmul.mubr.bf16.gmra.mxu0 %v273
    %v377 = vpop.f32.mrf.mxu0
    %v378 = vadd.f32 %v294, %v377
    %v379 = vpop.f32.mrf.mxu0
    %v380 = vpop.f32.mrf.mxu0
    %v381 = vpop.f32.mrf.mxu0
    %382 = vdwg.mxu0
    %v383 = vmax.f32 %v378, 0.0
    %v384 = vpack.c.bf16 %v383, %v383
    %s385 = scalar_lea.vmem [#allocation4], 192
    %v386 = vld [vmem:[%s385] sm:$0xf]
    %v387 = vld [vmem:[%s385 + $0x4] sm:$0xf]
    %v388 = vld [vmem:[%s385 + $0x8] sm:$0xf]
    %v389 = vld [vmem:[%s385 + $0xc] sm:$0xf]
    %v390 = vld [vmem:[%s385 + $0x10] sm:$0xf]
    %v391 = vld [vmem:[%s385 + $0x14] sm:$0xf]
    %v392 = vld [vmem:[%s385 + $0x18] sm:$0xf]
    %v393 = vld [vmem:[%s385 + $0x1c] sm:$0xf]
    %v394 = vld [vmem:[%s385 + $0x20] sm:$0xf]
    %v395 = vld [vmem:[%s385 + $0x24] sm:$0xf]
    %v396 = vld [vmem:[%s385 + $0x28] sm:$0xf]
    %v397 = vld [vmem:[%s385 + $0x2c] sm:$0xf]
    %v398 = vld [vmem:[%s385 + $0x30] sm:$0xf]
    %v399 = vld [vmem:[%s385 + $0x34] sm:$0xf]
    %v400 = vld [vmem:[%s385 + $0x38] sm:$0xf]
    %v401 = vld [vmem:[%s385 + $0x3c] sm:$0xf]
    %v402 = vlaneseq
    %v403 = vshrl.u32 %v402, 7
    %v404 = vsub.s32 3, %v403
    %v405 = vrot.slane %v53, %v404
    %v422 = vunpack.c.l.b16 %v386
    %v423 = vunpack.c.l.b16 %v387
    %v424 = vunpack.c.l.b16 %v388
    %v425 = vunpack.c.l.b16 %v389
    %v426 = vunpack.c.l.b16 %v390
    %v427 = vunpack.c.l.b16 %v391
    %v428 = vunpack.c.l.b16 %v392
    %v429 = vunpack.c.l.b16 %v393
    %v430 = vunpack.c.l.b16 %v394
    %v431 = vunpack.c.l.b16 %v395
    %v432 = vunpack.c.l.b16 %v396
    %v433 = vunpack.c.l.b16 %v397
    %v434 = vunpack.c.l.b16 %v398
    %v435 = vunpack.c.l.b16 %v399
    %v436 = vunpack.c.l.b16 %v400
    %v437 = vunpack.c.l.b16 %v401
    %v438 = vpack.c.b16 %v423, %v422
    %v439 = vpack.c.b16 %v425, %v424
    %v440 = vpack.c.b16 %v427, %v426
    %v441 = vpack.c.b16 %v429, %v428
    %v442 = vpack.c.b16 %v431, %v430
    %v443 = vpack.c.b16 %v433, %v432
    %v444 = vpack.c.b16 %v435, %v434
    %v445 = vpack.c.b16 %v437, %v436
    %454 = vmatprep.subr.bf16.mxu0 0
    %455 = vmatpush1.bf16.msra.mxu0 %v445
    %456 = vmatprep.subr.bf16.mxu0 0
    %457 = vmatpush1.bf16.msra.mxu0 %v444
    %458 = vmatprep.subr.bf16.mxu0 0
    %459 = vmatpush1.bf16.msra.mxu0 %v443
    %460 = vmatprep.subr.bf16.mxu0 0
    %461 = vmatpush1.bf16.msra.mxu0 %v442
    %462 = vmatprep.subr.bf16.mxu0 0
    %463 = vmatpush1.bf16.msra.mxu0 %v441
    %464 = vmatprep.subr.bf16.mxu0 0
    %465 = vmatpush1.bf16.msra.mxu0 %v440
    %466 = vmatprep.subr.bf16.mxu0 0
    %467 = vmatpush1.bf16.msra.mxu0 %v439
    %468 = vmatprep.subr.bf16.mxu0 0
    %469 = vmatpush1.bf16.msra.mxu0 %v438
    %470 = vmatprep.subr.bf16.mxu0 0
    %471 = vmatpush2.bf16.msra.mxu0 0
    %472 = vmatprep.subr.bf16.mxu0 0
    %473 = vmatpush2.bf16.msra.mxu0 0
    %474 = vmatprep.subr.bf16.mxu0 0
    %475 = vmatpush2.bf16.msra.mxu0 0
    %476 = vmatprep.subr.bf16.mxu0 0
    %477 = vmatpush2.bf16.msra.mxu0 0
    %478 = vmatprep.subr.bf16.mxu0 0
    %479 = vmatpush2.bf16.msra.mxu0 0
    %480 = vmatprep.subr.bf16.mxu0 0
    %481 = vmatpush2.bf16.msra.mxu0 0
    %482 = vmatprep.subr.bf16.mxu0 0
    %483 = vmatpush2.bf16.msra.mxu0 0
    %484 = vmatprep.subr.bf16.mxu0 0
    %485 = vmatpush2.bf16.msra.mxu0 0
    %486 = vmatprep.mubr.bf16.mxu0 0
    %487 = vmatmul.mubr.bf16.gmra.mxu0 %v384
    %v488 = vpop.f32.mrf.mxu0
    %v489 = vadd.f32 %v405, %v488
    %v490 = vpop.f32.mrf.mxu0
    %v491 = vpop.f32.mrf.mxu0
    %v492 = vpop.f32.mrf.mxu0
    %493 = vdwg.mxu0
    %v494 = vxor.u32 %v489, 2147483648
    %v495 = vmul.f32 %v494, 1.442695
    %v496 = vpow.pop %v495
    %v497 = vadd.f32 %v496, 1.0
    %v498 = vrcp.pop %v497
    %v499 = vmul.f32 1.0, %v498
    %vm500 = vcmask 1024
    %501 = vst.msk [vmem:[%s3] sm:$0x3] %vm500, %v499
    // Predicated region
    $region26: #{tpu_custom_call.1} parent=1 // pred_check
      _
    $region27: #{tpu_custom_call.1} parent=1 // pred_check_branch
      %503 = sbr.rel (0) target = $region29
    $region28: #{tpu_custom_call.1} parent=1 // pred_region
      _
    $region29: #{tpu_custom_call.1} parent=1 // pred_fallthru
      _
    // Predicated region
    $region30: #{tpu_custom_call.1} parent=1 // pred_check
      _
    $region31: #{tpu_custom_call.1} parent=1 // pred_check_branch
      %505 = sbr.rel (0) target = $region33
    $region32: #{tpu_custom_call.1} parent=1 // pred_region
      _
    $region33: #{tpu_custom_call.1} parent=1 // pred_fallthru
      _
    %506 = vsyncpa [#allocation3], 1
    %507 = vsyncpa [#allocation5], 1

</llo_original>
